<compile_context>
chip_gen: v5e
topology: v5e:2x2
jax: 0.10.0
libtpu: 0.0.40
codegen_flags: <defaults>
</compile_context>

<pallas_src>
import math
from functools import partial

import jax
import jax.numpy as jnp
import numpy as np
from jax.experimental import pallas as pl
from jax.experimental.pallas import tpu as pltpu


def _conv1x1_tile(x_tile, w_ref, *, cin, use_vpu):
    """1x1 conv of one (Cin, TM) tile with the resident (Cout, Cin) weight
    -> (Cout, TM) f32.

    use_vpu: unrolled outer-product accumulate on the VPU (lane-dense, no MXU
    padding) — preferred for tiny channel counts.  Otherwise MXU matmul.
    """
    if use_vpu:
        acc = w_ref[:, 0:1] * x_tile[0:1, :]          # (Cout,1)*(1,TM) -> (Cout,TM)
        for c in range(1, cin):                        # cin is small & static
            acc = acc + w_ref[:, c:c + 1] * x_tile[c:c + 1, :]
        return acc.astype(jnp.float32)
    return jnp.dot(w_ref[...], x_tile, preferred_element_type=jnp.float32)


def _conv_bn_stats_kernel(x_ref, w_ref, psum_ref, psq_ref, *, cin, use_vpu):
    """Pass 1: per-batch-element per-channel sum / sum-of-squares of the conv
    output, accumulated in the grid-resident output blocks.  The conv result
    is never written to HBM."""
    i = pl.program_id(1)                               # pixel-tile (reduction) axis

    @pl.when(i == 0)
    def _():
        psum_ref[...] = jnp.zeros_like(psum_ref)
        psq_ref[...] = jnp.zeros_like(psq_ref)

    y = _conv1x1_tile(x_ref[...], w_ref, cin=cin, use_vpu=use_vpu)   # (Cout, TM)
    psum_ref[...] += jnp.sum(y, axis=1, keepdims=True)               # (Cout, 1)
    psq_ref[...] += jnp.sum(y * y, axis=1, keepdims=True)


def _conv_affine_kernel(x_ref, w_ref, shift_ref, o_ref, *, cin, use_vpu):
    """Pass 2: conv with the scale-folded weight, add the per-channel shift.
    Output block is (Cout, TM): lane-dense, unmasked stores."""
    y = _conv1x1_tile(x_ref[...], w_ref, cin=cin, use_vpu=use_vpu)
    o_ref[...] = (y + shift_ref[...]).astype(o_ref.dtype)


def _pick_tile(hw, cin, cout, vmem_limit_bytes, target=8192):
    """Largest pixel tile <= a VMEM-aware target whose lane width is a multiple
    of 128 and divides H*W; otherwise fall back to the full spatial extent
    (always legal: block dim == array dim)."""
    budget = vmem_limit_bytes // 2                      # headroom for weight/acc/temps
    cap = budget // (2 * 4 * (cin + cout))              # double-buffered f32 in + out
    cap = max(128, (cap // 128) * 128)
    target = min(target, cap)
    if hw <= target:
        return hw
    t = target - (target % 128)
    while t >= 128:
        if hw % t == 0:
            return t
        t -= 128
    return hw


def conv_residual_forward(x_nchw, w_oihw, gamma, beta, *, eps=1e-5,
                          tm_target=8192,
                          vmem_limit_bytes=32 * 1024 * 1024):
    """Forward of ConvResidual.  x_nchw: (N, Cin, H, W) float32."""
    N, Cin, H, W = x_nchw.shape
    Cout = w_oihw.shape[0]
    HW = H * W
    tm = _pick_tile(HW, Cin, Cout, vmem_limit_bytes, tm_target)
    assert HW % tm == 0  # guaranteed by _pick_tile
    n_tiles = HW // tm
    use_vpu = Cin <= 16  # tiny channel counts: VPU outer-product beats padded MXU

    # NCHW is already channels-major per batch element: a pure reshape gives the
    # lane-dense (Cin, H*W) layout the kernels want — no transpose, no copy.
    x = x_nchw.reshape(N, Cin, HW)
    w = w_oihw.reshape(Cout, Cin).astype(jnp.float32)   # 1x1 kernel -> (Cout, Cin)

    grid = (N, n_tiles)
    x_spec = pl.BlockSpec((None, Cin, tm), lambda n, i: (n, 0, i))
    w_spec = pl.BlockSpec((Cout, Cin), lambda n, i: (0, 0))       # resident weight
    stat_spec = pl.BlockSpec((None, Cout, 1), lambda n, i: (n, 0, 0))

    # ---- Pass 1: fused conv + BN statistics (reads x once, writes 2*N*Cout f32) ----
    psum, psq = pl.pallas_call(
        partial(_conv_bn_stats_kernel, cin=Cin, use_vpu=use_vpu),
        out_shape=(jax.ShapeDtypeStruct((N, Cout, 1), jnp.float32),
                   jax.ShapeDtypeStruct((N, Cout, 1), jnp.float32)),
        grid_spec=pltpu.PrefetchScalarGridSpec(
            num_scalar_prefetch=0,
            grid=grid,
            in_specs=[x_spec, w_spec],
            out_specs=(stat_spec, stat_spec)),
        compiler_params=pltpu.CompilerParams(
            dimension_semantics=("parallel", "arbitrary"),
            vmem_limit_bytes=vmem_limit_bytes),
    )(x, w)

    # Tiny epilogue (Cout scalars): fold batch-partial stats + gamma/beta into a
    # per-channel affine  out = (scale*W) @ x + shift.
    m_total = jnp.float32(N * HW)
    total = jnp.sum(psum, axis=0)                      # (Cout, 1)
    totsq = jnp.sum(psq, axis=0)                       # (Cout, 1)
    mean = total / m_total
    var = jnp.maximum(totsq / m_total - mean * mean, 0.0)   # biased variance
    inv_std = jax.lax.rsqrt(var + jnp.float32(eps))
    scale = gamma.reshape(Cout, 1).astype(jnp.float32) * inv_std
    shift = beta.reshape(Cout, 1).astype(jnp.float32) - mean * scale
    w_fold = w * scale                                 # fold BN scale into the conv

    # ---- Pass 2: scale-folded conv + shift, lane-dense (Cout, TM) output blocks ----
    vec_spec = pl.BlockSpec((Cout, 1), lambda n, i: (0, 0))
    out = pl.pallas_call(
        partial(_conv_affine_kernel, cin=Cin, use_vpu=use_vpu),
        out_shape=jax.ShapeDtypeStruct((N, Cout, HW), jnp.float32),
        grid_spec=pltpu.PrefetchScalarGridSpec(
            num_scalar_prefetch=0,
            grid=grid,
            in_specs=[x_spec, w_spec, vec_spec],
            out_specs=pl.BlockSpec((None, Cout, tm), lambda n, i: (n, 0, i))),
        compiler_params=pltpu.CompilerParams(
            dimension_semantics=("parallel", "parallel"),
            vmem_limit_bytes=vmem_limit_bytes),
    )(x, w_fold, shift)

    return out.reshape(N, Cout, H, W)


if __name__ == "__main__":
    key = jax.random.PRNGKey(0)
    kx, kw = jax.random.split(key)

    N, Cin, Cout, H, W = 2, 4, 8, 16, 16
    x = jax.random.normal(kx, (N, Cin, H, W), dtype=jnp.float32)

    # conv_init: kaiming_normal_(mode='fan_out') -> std = sqrt(2 / (Cout*1*1));
    # conv bias initialized to 0 (cancels under training-mode BN).
    w_std = math.sqrt(2.0 / (Cout * 1 * 1))
    w_oihw = jax.random.normal(kw, (Cout, Cin, 1, 1), dtype=jnp.float32) * w_std

    # bn_init(bn, 1): gamma = 1, beta = 0.
    gamma = jnp.ones((Cout,), dtype=jnp.float32)
    beta = jnp.zeros((Cout,), dtype=jnp.float32)

    out = conv_residual_forward(x, w_oihw, gamma, beta)
    out = jax.block_until_ready(out)

    # Pure-JAX reference (same forward semantics) for a correctness check.
    w = w_oihw.reshape(Cout, Cin)
    y_ref = jnp.einsum("oc,nchw->nohw", w, x, precision=jax.lax.Precision.HIGHEST)
    mean = y_ref.mean(axis=(0, 2, 3), keepdims=True)
    var = ((y_ref - mean) ** 2).mean(axis=(0, 2, 3), keepdims=True)   # biased var
    ref = ((y_ref - mean) / jnp.sqrt(var + 1e-5) * gamma.reshape(1, Cout, 1, 1)
           + beta.reshape(1, Cout, 1, 1))

    np.testing.assert_allclose(np.asarray(out), np.asarray(ref), rtol=1e-5, atol=1e-5)
    assert out.shape == (N, Cout, H, W)
    print("KERNEL_OK")
</pallas_src>

<mosaic_0001>
module attributes {stable_mosaic.version = 11 : i64} {
  func.func @_conv_bn_stats_kernel(%arg0: i32, %arg1: i32, %arg2: memref<1x4x256xf32, #tpu.memory_space<vmem>>, %arg3: memref<8x4xf32, #tpu.memory_space<vmem>>, %arg4: memref<1x8x1xf32, #tpu.memory_space<vmem>>, %arg5: memref<1x8x1xf32, #tpu.memory_space<vmem>>) attributes {dimension_semantics = [#tpu.dimension_semantics<parallel>, #tpu.dimension_semantics<arbitrary>], iteration_bounds = array<i64: 2, 1>, scalar_prefetch = 0 : i64, scratch_operands = 0 : i64, tpu.core_type = #tpu.core_type<tc>, window_params = [{transform_indices = @transform_0, window_bounds = array<i64: 1, 4, 256>}, {pipeline_mode = #tpu.pipeline_mode<synchronous>, transform_indices = @transform_1, window_bounds = array<i64: 8, 4>}, {transform_indices = @transform_2, window_bounds = array<i64: 1, 8, 1>}, {transform_indices = @transform_3, window_bounds = array<i64: 1, 8, 1>}]} {
    %c0_i32 = arith.constant 0 : i32
    %0 = arith.cmpi eq, %arg1, %c0_i32 : i32
    %1 = arith.extui %0 : i1 to i32
    %c0_i32_0 = arith.constant 0 : i32
    %2 = arith.cmpi ne, %1, %c0_i32_0 : i32
    scf.if %2 {
      %cst_21 = arith.constant 0.000000e+00 : f32
      %45 = vector.broadcast %cst_21 : f32 to vector<8x1xf32>
      %c0_22 = arith.constant 0 : index
      %c0_23 = arith.constant 0 : index
      %c0_24 = arith.constant 0 : index
      %46 = vector.load %arg4[%c0_22, %c0_23, %c0_24] : memref<1x8x1xf32, #tpu.memory_space<vmem>>, vector<1x8x1xf32>
      %47 = vector.shape_cast %46 : vector<1x8x1xf32> to vector<8x1xf32>
      %48 = vector.shape_cast %45 : vector<8x1xf32> to vector<1x8x1xf32>
      tpu.vector_store %arg4[%c0_22, %c0_23, %c0_24], %48 {strides = array<i32>} : memref<1x8x1xf32, #tpu.memory_space<vmem>>, vector<1x8x1xf32>,
      %cst_25 = arith.constant 0.000000e+00 : f32
      %49 = vector.broadcast %cst_25 : f32 to vector<8x1xf32>
      %c0_26 = arith.constant 0 : index
      %c0_27 = arith.constant 0 : index
      %c0_28 = arith.constant 0 : index
      %50 = vector.load %arg5[%c0_26, %c0_27, %c0_28] : memref<1x8x1xf32, #tpu.memory_space<vmem>>, vector<1x8x1xf32>
      %51 = vector.shape_cast %50 : vector<1x8x1xf32> to vector<8x1xf32>
      %52 = vector.shape_cast %49 : vector<8x1xf32> to vector<1x8x1xf32>
      tpu.vector_store %arg5[%c0_26, %c0_27, %c0_28], %52 {strides = array<i32>} : memref<1x8x1xf32, #tpu.memory_space<vmem>>, vector<1x8x1xf32>,
    } else {
    }
    %c0 = arith.constant 0 : index
    %c0_1 = arith.constant 0 : index
    %c0_2 = arith.constant 0 : index
    %3 = vector.load %arg2[%c0, %c0_1, %c0_2] : memref<1x4x256xf32, #tpu.memory_space<vmem>>, vector<1x4x256xf32>
    %4 = vector.shape_cast %3 : vector<1x4x256xf32> to vector<4x256xf32>
    %c0_3 = arith.constant 0 : index
    %c0_4 = arith.constant 0 : index
    %5 = vector.load %arg3[%c0_3, %c0_4] : memref<8x4xf32, #tpu.memory_space<vmem>>, vector<8x1xf32>
    %6 = vector.extract_strided_slice %4 {offsets = [0, 0], sizes = [1, 256], strides = [1, 1]} : vector<4x256xf32> to vector<1x256xf32>
    %7 = vector.broadcast %5 : vector<8x1xf32> to vector<8x256xf32>
    %8 = vector.broadcast %6 : vector<1x256xf32> to vector<8x256xf32>
    %9 = arith.mulf %7, %8 : vector<8x256xf32>
    %c0_5 = arith.constant 0 : index
    %c1 = arith.constant 1 : index
    %10 = vector.load %arg3[%c0_5, %c1] : memref<8x4xf32, #tpu.memory_space<vmem>>, vector<8x1xf32>
    %11 = vector.extract_strided_slice %4 {offsets = [1, 0], sizes = [1, 256], strides = [1, 1]} : vector<4x256xf32> to vector<1x256xf32>
    %12 = vector.broadcast %10 : vector<8x1xf32> to vector<8x256xf32>
    %13 = vector.broadcast %11 : vector<1x256xf32> to vector<8x256xf32>
    %14 = arith.mulf %12, %13 : vector<8x256xf32>
    %15 = arith.addf %9, %14 : vector<8x256xf32>
    %c0_6 = arith.constant 0 : index
    %c2 = arith.constant 2 : index
    %16 = vector.load %arg3[%c0_6, %c2] : memref<8x4xf32, #tpu.memory_space<vmem>>, vector<8x1xf32>
    %17 = vector.extract_strided_slice %4 {offsets = [2, 0], sizes = [1, 256], strides = [1, 1]} : vector<4x256xf32> to vector<1x256xf32>
    %18 = vector.broadcast %16 : vector<8x1xf32> to vector<8x256xf32>
    %19 = vector.broadcast %17 : vector<1x256xf32> to vector<8x256xf32>
    %20 = arith.mulf %18, %19 : vector<8x256xf32>
    %21 = arith.addf %15, %20 : vector<8x256xf32>
    %c0_7 = arith.constant 0 : index
    %c3 = arith.constant 3 : index
    %22 = vector.load %arg3[%c0_7, %c3] : memref<8x4xf32, #tpu.memory_space<vmem>>, vector<8x1xf32>
    %23 = vector.extract_strided_slice %4 {offsets = [3, 0], sizes = [1, 256], strides = [1, 1]} : vector<4x256xf32> to vector<1x256xf32>
    %24 = vector.broadcast %22 : vector<8x1xf32> to vector<8x256xf32>
    %25 = vector.broadcast %23 : vector<1x256xf32> to vector<8x256xf32>
    %26 = arith.mulf %24, %25 : vector<8x256xf32>
    %27 = arith.addf %21, %26 : vector<8x256xf32>
    %c0_8 = arith.constant 0 : index
    %c0_9 = arith.constant 0 : index
    %c0_10 = arith.constant 0 : index
    %28 = vector.load %arg4[%c0_8, %c0_9, %c0_10] : memref<1x8x1xf32, #tpu.memory_space<vmem>>, vector<1x8x1xf32>
    %29 = vector.shape_cast %28 : vector<1x8x1xf32> to vector<8x1xf32>
    %cst = arith.constant dense<0.000000e+00> : vector<8xf32>
    %30 = vector.multi_reduction <add>, %27, %cst [1] : vector<8x256xf32> to vector<8xf32>
    %31 = vector.shape_cast %30 : vector<8xf32> to vector<8x1xf32>
    %32 = arith.addf %29, %31 : vector<8x1xf32>
    %c0_11 = arith.constant 0 : index
    %c0_12 = arith.constant 0 : index
    %c0_13 = arith.constant 0 : index
    %33 = vector.load %arg4[%c0_11, %c0_12, %c0_13] : memref<1x8x1xf32, #tpu.memory_space<vmem>>, vector<1x8x1xf32>
    %34 = vector.shape_cast %33 : vector<1x8x1xf32> to vector<8x1xf32>
    %35 = vector.shape_cast %32 : vector<8x1xf32> to vector<1x8x1xf32>
    tpu.vector_store %arg4[%c0_11, %c0_12, %c0_13], %35 {strides = array<i32>} : memref<1x8x1xf32, #tpu.memory_space<vmem>>, vector<1x8x1xf32>,
    %c0_14 = arith.constant 0 : index
    %c0_15 = arith.constant 0 : index
    %c0_16 = arith.constant 0 : index
    %36 = vector.load %arg5[%c0_14, %c0_15, %c0_16] : memref<1x8x1xf32, #tpu.memory_space<vmem>>, vector<1x8x1xf32>
    %37 = vector.shape_cast %36 : vector<1x8x1xf32> to vector<8x1xf32>
    %38 = arith.mulf %27, %27 : vector<8x256xf32>
    %cst_17 = arith.constant dense<0.000000e+00> : vector<8xf32>
    %39 = vector.multi_reduction <add>, %38, %cst_17 [1] : vector<8x256xf32> to vector<8xf32>
    %40 = vector.shape_cast %39 : vector<8xf32> to vector<8x1xf32>
    %41 = arith.addf %37, %40 : vector<8x1xf32>
    %c0_18 = arith.constant 0 : index
    %c0_19 = arith.constant 0 : index
    %c0_20 = arith.constant 0 : index
    %42 = vector.load %arg5[%c0_18, %c0_19, %c0_20] : memref<1x8x1xf32, #tpu.memory_space<vmem>>, vector<1x8x1xf32>
    %43 = vector.shape_cast %42 : vector<1x8x1xf32> to vector<8x1xf32>
    %44 = vector.shape_cast %41 : vector<8x1xf32> to vector<1x8x1xf32>
    tpu.vector_store %arg5[%c0_18, %c0_19, %c0_20], %44 {strides = array<i32>} : memref<1x8x1xf32, #tpu.memory_space<vmem>>, vector<1x8x1xf32>,
    return
  }
  func.func @transform_0(%arg0: i32, %arg1: i32) -> (i32, i32, i32) {
    %c0_i32 = arith.constant 0 : i32
    %c0_i32_0 = arith.constant 0 : i32
    return %arg0, %c0_i32, %arg1 : i32, i32, i32
  }
  func.func @transform_1(%arg0: i32, %arg1: i32) -> (i32, i32) {
    %c0_i32 = arith.constant 0 : i32
    %c0_i32_0 = arith.constant 0 : i32
    %c0_i32_1 = arith.constant 0 : i32
    return %c0_i32, %c0_i32_0 : i32, i32
  }
  func.func @transform_2(%arg0: i32, %arg1: i32) -> (i32, i32, i32) {
    %c0_i32 = arith.constant 0 : i32
    %c0_i32_0 = arith.constant 0 : i32
    %c0_i32_1 = arith.constant 0 : i32
    return %arg0, %c0_i32, %c0_i32_0 : i32, i32, i32
  }
  func.func @transform_3(%arg0: i32, %arg1: i32) -> (i32, i32, i32) {
    %c0_i32 = arith.constant 0 : i32
    %c0_i32_0 = arith.constant 0 : i32
    %c0_i32_1 = arith.constant 0 : i32
    return %arg0, %c0_i32, %c0_i32_0 : i32, i32, i32
  }
}

</mosaic_0001>

<llo_original>
// kernel: tpu_custom_call.1
$region0: #{tpu_custom_call.1}
  #allocation0 [shape = 'u32[]', space=smem, size = 0x4, offset = 0x4, fixed_abs, tag = 'smem constant byte address 0x4 - core index']
  #allocation1 [shape = 'u32[72,128]{1,0:T(1,128)}', space=vmem, size = 0x9000, scoped, tag = 'internal scratch']
  %s0 = inlined_call_operand.hbm [shape: f32[2,4,256], index: 0, kind: input, shape index: {}]
  %s1 = inlined_call_operand.vmem [shape: f32[8,4], index: 1, kind: input, shape index: {}]
  %s2 = inlined_call_operand.vmem [shape: f32[2,8,1], index: 2, kind: output, shape index: {0}]
  %s3 = inlined_call_operand.vmem [shape: f32[2,8,1], index: 3, kind: output, shape index: {1}]
  %4 = xla_tuple %s2, %s3
  %s5 = sld [smem:[#allocation0]]
  $region57: #{tpu_custom_call.1} parent=0
    _
  %s7 = ssub.s32 1, %s5
  %s8 = scalar_select 0, %s7, %s5
  $region1: #{tpu_custom_call.1} parent=0
    #allocation2 [shape = 'u8[8192]{0}', space=vmem, size = 0x2000, scoped, tag = 'input window, operand 0']
    #allocation3 [shape = 's32[2]{0}', space=sflag, size = 0x8, scoped, tag = 'scoped memory for tpu_custom_call.1']
    %9 = vsyncpa [#allocation3], 0
    %s10 = scalar_lea.sflag [#allocation3], 1
    %11 = vsyncpa %s10, 0
    loop: start=0, step=1, limit=4
    $region2: #{tpu_custom_call.1} parent=1 // loop_pre_header
      _
    $region3: #{tpu_custom_call.1} parent=1 // loop_header
      %s13 = sphi 0, %s17
      %p14 = scmp.ge.s32.totalorder %s13, 4
      %s20 = sphi 0, %s32
      %s21 = sphi 0, %s28
      %s22 = sphi 0, %s20
      %s23 = sphi 0, %s21
      %s24 = sphi 0, %s22
      %s25 = sphi 0, %s23
      %s37 = sphi 0, %s39
      %s40 = sphi 0, %s37
      %s41 = sphi 0, %s40
      %s57 = sphi 0, %s41
      %s61 = sphi 0, %s61
      %s63 = sphi 0, %s61
      %s64 = sphi 0, %s63
      %s78 = sphi 0, %s64
      %s84 = sphi 0, %s86
      %s87 = sphi 0, %s84
      %s88 = sphi 0, %s87
      %s104 = sphi 0, %s88
      %s110 = sphi 0, %s112
      %s113 = sphi 0, %s110
      %s114 = sphi 0, %s113
      %s130 = sphi 0, %s114
    $region4: #{tpu_custom_call.1} parent=1 // loop_header_branch
      %16 = sbr.rel (%p14) target = $region8
    $region5: #{tpu_custom_call.1} parent=1 // loop_body
      %s18 = ssub.s32 %s13, 1
      %s19 = ssub.s32 %s13, 2
      %s26 = sadd.s32 1, %s21
      %p27 = scmp.ge.s32.totalorder %s26, 1
      %s28 = scalar_select %p27, 0, %s26
      %s29 = sadd.s32 1, %s20
      %s30 = scalar_select %p27, %s29, %s20
      %p31 = scmp.ge.s32.totalorder %s30, 2
      %s32 = scalar_select %p31, 0, %s30
      %s33 = ssub.s32 %s20, %s32
      %s34 = ssub.s32 %s21, %s28
      %s35 = sor.u32 %s33, %s34
      %p36 = scmp.eq.s32.totalorder %s35, 0
      %s38 = sadd.s32 %s37, 1
      %s39 = scalar_select %p36, %s37, %s38
      %p42 = pneg %p36
      %p43 = scmp.eq.s32.totalorder %s13, 1
      %p44 = por %p42, %p43
      %p45 = scmp.ne.s32.totalorder %s37, %s40
      %p46 = scmp.eq.s32.totalorder %s13, 0
      %p47 = por %p45, %p46
      %p48 = scmp.ne.s32.totalorder %s37, %s40
      %p49 = scmp.eq.s32.totalorder %s18, 1
      %p50 = por %p48, %p49
      %p51 = scmp.ne.s32.totalorder %s40, %s41
      %p52 = scmp.eq.s32.totalorder %s18, 0
      %p53 = por %p51, %p52
      %p54 = scmp.ne.s32.totalorder %s40, %s41
      %p55 = scmp.eq.s32.totalorder %s19, 1
      %p56 = por %p54, %p55
      %p58 = scmp.ne.s32.totalorder %s41, %s57
      %p59 = scmp.eq.s32.totalorder %s19, 0
      %p60 = por %p58, %p59
      %s62 = sadd.s32 %s61, 1
      %p65 = scmp.eq.s32.totalorder %s13, 1
      %p66 = scmp.ne.s32.totalorder %s61, %s63
      %p67 = scmp.eq.s32.totalorder %s13, 0
      %p68 = por %p66, %p67
      %p69 = scmp.ne.s32.totalorder %s61, %s63
      %p70 = scmp.eq.s32.totalorder %s18, 1
      %p71 = por %p69, %p70
      %p72 = scmp.ne.s32.totalorder %s63, %s64
      %p73 = scmp.eq.s32.totalorder %s18, 0
      %p74 = por %p72, %p73
      %p75 = scmp.ne.s32.totalorder %s63, %s64
      %p76 = scmp.eq.s32.totalorder %s19, 1
      %p77 = por %p75, %p76
      %p79 = scmp.ne.s32.totalorder %s64, %s78
      %p80 = scmp.eq.s32.totalorder %s19, 0
      %p81 = por %p79, %p80
      %s82 = ssub.s32 %s20, %s32
      %p83 = scmp.eq.s32.totalorder %s82, 0
      %s85 = sadd.s32 %s84, 1
      %s86 = scalar_select %p83, %s84, %s85
      %p89 = pneg %p83
      %p90 = scmp.eq.s32.totalorder %s13, 1
      %p91 = por %p89, %p90
      %p92 = scmp.ne.s32.totalorder %s84, %s87
      %p93 = scmp.eq.s32.totalorder %s13, 0
      %p94 = por %p92, %p93
      %p95 = scmp.ne.s32.totalorder %s84, %s87
      %p96 = scmp.eq.s32.totalorder %s18, 1
      %p97 = por %p95, %p96
      %p98 = scmp.ne.s32.totalorder %s87, %s88
      %p99 = scmp.eq.s32.totalorder %s18, 0
      %p100 = por %p98, %p99
      %p101 = scmp.ne.s32.totalorder %s87, %s88
      %p102 = scmp.eq.s32.totalorder %s19, 1
      %p103 = por %p101, %p102
      %p105 = scmp.ne.s32.totalorder %s88, %s104
      %p106 = scmp.eq.s32.totalorder %s19, 0
      %p107 = por %p105, %p106
      %s108 = ssub.s32 %s20, %s32
      %p109 = scmp.eq.s32.totalorder %s108, 0
      %s111 = sadd.s32 %s110, 1
      %s112 = scalar_select %p109, %s110, %s111
      %p115 = pneg %p109
      %p116 = scmp.eq.s32.totalorder %s13, 1
      %p117 = por %p115, %p116
      %p118 = scmp.ne.s32.totalorder %s110, %s113
      %p119 = scmp.eq.s32.totalorder %s13, 0
      %p120 = por %p118, %p119
      %p121 = scmp.ne.s32.totalorder %s110, %s113
      %p122 = scmp.eq.s32.totalorder %s18, 1
      %p123 = por %p121, %p122
      %p124 = scmp.ne.s32.totalorder %s113, %s114
      %p125 = scmp.eq.s32.totalorder %s18, 0
      %p126 = por %p124, %p125
      %p127 = scmp.ne.s32.totalorder %s113, %s114
      %p128 = scmp.eq.s32.totalorder %s19, 1
      %p129 = por %p127, %p128
      %p131 = scmp.ne.s32.totalorder %s114, %s130
      %p132 = scmp.eq.s32.totalorder %s19, 0
      %p133 = por %p131, %p132
      %p134 = scmp.le.s32.totalorder 1, %s13
      %p135 = scmp.lt.s32.totalorder %s13, 3
      %p136 = pnand %p134, %p135
      %p137 = pneg %p136
      // Predicated region
      $region9: #{tpu_custom_call.1} parent=5 // pred_check
        _
      $region10: #{tpu_custom_call.1} parent=5 // pred_check_branch
        %139 = sbr.rel (%p136) target = $region12
      $region11: #{tpu_custom_call.1} parent=5 // pred_region
        %s140 = ssub.s32 %s13, 1
        // Predicated region
        $region13: #{tpu_custom_call.1} parent=11 // pred_check
          %p141 = pneg %p74
        $region14: #{tpu_custom_call.1} parent=11 // pred_check_branch
          %143 = sbr.rel (%p141) target = $region16
        $region15: #{tpu_custom_call.1} parent=11 // pred_region
          _
        $region16: #{tpu_custom_call.1} parent=11 // pred_fallthru
          _
      $region12: #{tpu_custom_call.1} parent=5 // pred_fallthru
        _
      %p144 = scmp.lt.s32.totalorder %s13, 2
      // Predicated region
      $region17: #{tpu_custom_call.1} parent=5 // pred_check
        %p145 = pneg %p144
      $region18: #{tpu_custom_call.1} parent=5 // pred_check_branch
        %147 = sbr.rel (%p145) target = $region20
      $region19: #{tpu_custom_call.1} parent=5 // pred_region
        // Predicated region
        $region21: #{tpu_custom_call.1} parent=19 // pred_check
          %p148 = pneg %p47
        $region22: #{tpu_custom_call.1} parent=19 // pred_check_branch
          %150 = sbr.rel (%p148) target = $region24
        $region23: #{tpu_custom_call.1} parent=19 // pred_region
          %s151 = sand.u32 %s37, 1
          %s152 = scalar_lea.sflag [#allocation3], %s151
          %s153 = sand.u32 %s37, 1
          %s154 = smul.addr %s153, 8
          %s155 = scalar_lea.vmem [#allocation2], %s154
          %s156 = smul.u32 2, %s21
          %158 = vsyncadd %s152, 0
          %s159 = smul.addr %s20, 2
          %s160 = sadd.s32 %s156, %s159
          %s161 = smul.addr %s160, 4
          %s162 = scalar_lea.hbm %s0, %s161
          %s164 = sshll.u32 %s162, 4
          %s165 = int_to_ptr.hbm [resolvable:$true] %s164
          %s166 = sshll.u32 %s155, 4
          %s167 = int_to_ptr.vmem [resolvable:$true] %s166
          %169 = dma.hbm_to_vmem [thread:$0]  %s165, 128, %s167, %s152
        $region24: #{tpu_custom_call.1} parent=19 // pred_fallthru
          _
      $region20: #{tpu_custom_call.1} parent=5 // pred_fallthru
        _
      %p170 = scmp.le.s32.totalorder 1, %s13
      %p171 = scmp.lt.s32.totalorder %s13, 3
      %p172 = pnand %p170, %p171
      %p173 = pneg %p172
      // Predicated region
      $region25: #{tpu_custom_call.1} parent=5 // pred_check
        _
      $region26: #{tpu_custom_call.1} parent=5 // pred_check_branch
        %175 = sbr.rel (%p172) target = $region28
      $region27: #{tpu_custom_call.1} parent=5 // pred_region
        %s176 = ssub.s32 %s13, 1
        %s177 = sand.u32 %s40, 1
        %s178 = scalar_lea.sflag [#allocation3], %s177
        %s179 = sand.u32 %s40, 1
        %s180 = smul.addr %s179, 8
        %s181 = scalar_lea.vmem [#allocation2], %s180
        // Predicated region
        $region29: #{tpu_custom_call.1} parent=27 // pred_check
          %p182 = pneg %p53
        $region30: #{tpu_custom_call.1} parent=27 // pred_check_branch
          %184 = sbr.rel (%p182) target = $region32
        $region31: #{tpu_custom_call.1} parent=27 // pred_region
          %186 = dma.done %s178, 128
        $region32: #{tpu_custom_call.1} parent=27 // pred_fallthru
          _
        %s187 = sand.u32 %s40, 1
        %s188 = scalar_lea.sflag [#allocation3], %s187
        %s189 = sand.u32 %s40, 1
        %s190 = smul.addr %s189, 8
        %s191 = scalar_lea.vmem [#allocation2], %s190
        %p192 = pneg %p53
        %p193 = pneg %p50
        %p194 = pneg %p74
        %p195 = pneg %p71
        %p196 = pneg %p100
        %p197 = pneg %p97
        %p198 = scmp.lt.s32.totalorder %s22, 1
        %s199 = scalar_select %p198, %s22, 1
        %s200 = smul.addr %s199, 8
        %s201 = scalar_lea.vmem %s2, %s200
        %p202 = pneg %p126
        %p203 = pneg %p123
        %p204 = scmp.lt.s32.totalorder %s22, 1
        %s205 = scalar_select %p204, %s22, 1
        %s206 = smul.addr %s205, 8
        %s207 = scalar_lea.vmem %s3, %s206
        %s208 = smul.u32 2, %s23
        %p209 = scmp.lt.s32.totalorder %s22, 1
        %s210 = scalar_select %p209, %s22, 1
        %s211 = smul.addr %s210, 8
        %s212 = scalar_lea.vmem %s2, %s211
        %p213 = scmp.lt.s32.totalorder %s22, 1
        %s214 = scalar_select %p213, %s22, 1
        %s215 = smul.addr %s214, 8
        %s216 = scalar_lea.vmem %s3, %s215
        %p217 = scmp.eq.s32.totalorder %s23, 0
        // Predicated region
        $region33: #{tpu_custom_call.1} parent=27 // pred_check
          %p218 = pneg %p217
        $region34: #{tpu_custom_call.1} parent=27 // pred_check_branch
          %220 = sbr.rel (%p218) target = $region36
        $region35: #{tpu_custom_call.1} parent=27 // pred_region
          %vm221 = vcmask 7168
          %222 = vst.msk [vmem:[%s212] sm:$0xff] %vm221, 0.0
          %223 = vst.msk [vmem:[%s216] sm:$0xff] %vm221, 0.0
        $region36: #{tpu_custom_call.1} parent=27 // pred_fallthru
          _
        %v224 = vld [vmem:[%s181] sm:$0xff]
        %v225 = vld [vmem:[%s1] sm:$0xff]
        %227 = vset.pattern.permute.xlu0 0
        %228 = vperm.xlu0 %227, %v225
        %v229 = vpop.permute.xlu0 %228
        %v232 = vperm.slane %v224, 0
        %v233 = vperm.slane %v224, 4
        %v236 = vperm.slane %v232, 0
        %v237 = vperm.slane %v233, 0
        %v238 = vmul.f32 %v229, %v236
        %v239 = vmul.f32 %v229, %v237
        %240 = vset.pattern.permute.xlu0 1
        %241 = vperm.xlu0 %240, %v225
        %v242 = vpop.permute.xlu0 %241
        %v244 = vperm.slane %v224, 1
        %v245 = vperm.slane %v224, 5
        %v248 = vperm.slane %v244, 1
        %v249 = vperm.slane %v245, 1
        %v250 = vmul.f32 %v242, %v248
        %v251 = vmul.f32 %v242, %v249
        %v252 = vadd.f32 %v238, %v250
        %v253 = vadd.f32 %v239, %v251
        %254 = vset.pattern.permute.xlu0 2
        %255 = vperm.xlu0 %254, %v225
        %v256 = vpop.permute.xlu0 %255
        %v258 = vperm.slane %v224, 2
        %v259 = vperm.slane %v224, 6
        %v262 = vperm.slane %v258, 2
        %v263 = vperm.slane %v259, 2
        %v264 = vmul.f32 %v256, %v262
        %v265 = vmul.f32 %v256, %v263
        %v266 = vadd.f32 %v252, %v264
        %v267 = vadd.f32 %v253, %v265
        %268 = vset.pattern.permute.xlu0 3
        %269 = vperm.xlu0 %268, %v225
        %v270 = vpop.permute.xlu0 %269
        %v272 = vperm.slane %v224, 3
        %v273 = vperm.slane %v224, 7
        %v276 = vperm.slane %v272, 3
        %v277 = vperm.slane %v273, 3
        %v278 = vmul.f32 %v270, %v276
        %v279 = vmul.f32 %v270, %v277
        %v280 = vadd.f32 %v266, %v278
        %v281 = vadd.f32 %v267, %v279
        %v282 = vld [vmem:[%s212] sm:$0xff]
        %v283 = vadd.f32 %v280, %v281
        %284 = vadd.xlane.f32.xlu0 %v283
        %v285 = vpop.xlane.xlu0 %284
        %v286 = vadd.f32 %v282, %v285
        %vm287 = vcmask 7168
        %288 = vst.msk [vmem:[%s212] sm:$0xff] %vm287, %v286
        %v289 = vld [vmem:[%s216] sm:$0xff]
        %v290 = vmul.f32 %v280, %v280
        %v291 = vmul.f32 %v281, %v281
        %v292 = vadd.f32 %v290, %v291
        %293 = vadd.xlane.f32.xlu0 %v292
        %v294 = vpop.xlane.xlu0 %293
        %v295 = vadd.f32 %v289, %v294
        %296 = vst.msk [vmem:[%s216] sm:$0xff] %vm287, %v295
        %p297 = scmp.lt.s32.totalorder %s22, 1
        %s298 = scalar_select %p297, %s22, 1
        %s299 = smul.addr %s298, 8
        %s300 = scalar_lea.vmem %s2, %s299
        %p301 = scmp.lt.s32.totalorder %s22, 1
        %s302 = scalar_select %p301, %s22, 1
        %s303 = smul.addr %s302, 8
        %s304 = scalar_lea.vmem %s3, %s303
        // Predicated region
        $region37: #{tpu_custom_call.1} parent=27 // pred_check
          %p305 = pneg %p97
        $region38: #{tpu_custom_call.1} parent=27 // pred_check_branch
          %307 = sbr.rel (%p305) target = $region40
        $region39: #{tpu_custom_call.1} parent=27 // pred_region
          _
        $region40: #{tpu_custom_call.1} parent=27 // pred_fallthru
          _
        // Predicated region
        $region41: #{tpu_custom_call.1} parent=27 // pred_check
          %p308 = pneg %p123
        $region42: #{tpu_custom_call.1} parent=27 // pred_check_branch
          %310 = sbr.rel (%p308) target = $region44
        $region43: #{tpu_custom_call.1} parent=27 // pred_region
          _
        $region44: #{tpu_custom_call.1} parent=27 // pred_fallthru
          _
      $region28: #{tpu_custom_call.1} parent=5 // pred_fallthru
        _
      %p311 = scmp.le.s32.totalorder 2, %s13
      // Predicated region
      $region45: #{tpu_custom_call.1} parent=5 // pred_check
        %p312 = pneg %p311
      $region46: #{tpu_custom_call.1} parent=5 // pred_check_branch
        %314 = sbr.rel (%p312) target = $region48
      $region47: #{tpu_custom_call.1} parent=5 // pred_region
        %s315 = ssub.s32 %s13, 2
        // Predicated region
        $region49: #{tpu_custom_call.1} parent=47 // pred_check
          %p316 = pneg %p103
        $region50: #{tpu_custom_call.1} parent=47 // pred_check_branch
          %318 = sbr.rel (%p316) target = $region52
        $region51: #{tpu_custom_call.1} parent=47 // pred_region
          %p319 = scmp.lt.s32.totalorder %s24, 1
          %s320 = scalar_select %p319, %s24, 1
          %s321 = smul.addr %s320, 8
          %s322 = scalar_lea.vmem %s2, %s321
        $region52: #{tpu_custom_call.1} parent=47 // pred_fallthru
          _
        // Predicated region
        $region53: #{tpu_custom_call.1} parent=47 // pred_check
          %p323 = pneg %p129
        $region54: #{tpu_custom_call.1} parent=47 // pred_check_branch
          %325 = sbr.rel (%p323) target = $region56
        $region55: #{tpu_custom_call.1} parent=47 // pred_region
          %p326 = scmp.lt.s32.totalorder %s24, 1
          %s327 = scalar_select %p326, %s24, 1
          %s328 = smul.addr %s327, 8
          %s329 = scalar_lea.vmem %s3, %s328
        $region56: #{tpu_custom_call.1} parent=47 // pred_fallthru
          _
      $region48: #{tpu_custom_call.1} parent=5 // pred_fallthru
        _
    $region6: #{tpu_custom_call.1} parent=1 // loop_footer
      %s17 = sadd.s32 1, %s13
    $region7: #{tpu_custom_call.1} parent=1 // loop_footer_branch
      %12 = sbr.rel target = $region3
    $region8: #{tpu_custom_call.1} parent=1 // loop_exit
      _
    %330 = vsyncpa [#allocation3], 1
    %s331 = scalar_lea.sflag [#allocation3], 1
    %332 = vsyncpa %s331, 1

</llo_original>
